<compile_context>
chip_gen: v5e
topology: v5e:2x2
jax: 0.10.0
libtpu: 0.0.40
codegen_flags: <defaults>
</compile_context>

<pallas_src>
import jax
import jax.numpy as jnp
from jax.experimental import pallas as pl
from jax.experimental.pallas import tpu as pltpu


def _adj_kernel(w_ref, xyz_ref, lam_ref, adj_ref, wsig_ref):
    # w_ref:    (1, bf)   raw weight tile (block index invariant along batch axis)
    # xyz_ref:  (bb, bf)  xyz adjacency tile
    # lam_ref:  (bb, bf)  lambda adjacency tile
    # adj_ref:  (bb, bf)  mixed adjacency output tile
    # wsig_ref: (1, bf)   sigmoid(weight) output tile (resident across batch axis)
    w = jax.nn.sigmoid(w_ref[...].astype(jnp.float32))

    @pl.when(pl.program_id(1) == 0)
    def _():
        wsig_ref[...] = w.astype(wsig_ref.dtype)

    xyz = xyz_ref[...].astype(jnp.float32)
    lam = lam_ref[...].astype(jnp.float32)
    # adj = w*xyz + (1-w)*lam  ==  lam + w*(xyz - lam)
    adj_ref[...] = (lam + w * (xyz - lam)).astype(adj_ref.dtype)


def _round_up(x, m):
    return ((x + m - 1) // m) * m


def _choose_tiles(b_pad, f_pad, itemsize, *, target_tile_bytes=2 << 20,
                  max_lane_tile=32768):
    """Pick (batch_tile, lane_tile) that exactly divide the padded dims."""
    # Lane tile: largest multiple of 128 dividing f_pad, capped.
    bf = min(f_pad, max_lane_tile)
    bf -= bf % 128
    while f_pad % bf:
        bf -= 128
    # Batch tile: multiple of 8 dividing b_pad, sized so bb*bf*itemsize is
    # roughly target_tile_bytes per stream.
    rows = max(8, target_tile_bytes // (bf * itemsize))
    bb = min(b_pad, rows - rows % 8)
    bb = max(8, bb)
    while b_pad % bb:
        bb -= 8
    return bb, bf


def adjattention_forward(weight, xyzadj, lamdaadj, *, target_tile_bytes=2 << 20):
    """weight: (N, N); xyzadj, lamdaadj: (B, N, N).

    Returns (adj, sigmoid_weight). sigmoid_weight mirrors the PyTorch in-place
    `self.weight.data.copy_(sigmoid(weight))` update (functional JAX: caller
    re-binds the parameter).
    """
    N = weight.shape[0]
    B = xyzadj.shape[0]
    assert weight.shape == (N, N)
    assert xyzadj.shape == (B, N, N)
    assert lamdaadj.shape == (B, N, N)

    F = N * N
    # Lane-dense layout: flatten the (N, N) adjacency plane onto the lane axis.
    F_pad = _round_up(F, 128)
    B_pad = _round_up(B, 8)

    w_flat = weight.reshape(1, F)
    xyz_flat = xyzadj.reshape(B, F)
    lam_flat = lamdaadj.reshape(B, F)
    if F_pad != F:
        w_flat = jnp.pad(w_flat, ((0, 0), (0, F_pad - F)))
        xyz_flat = jnp.pad(xyz_flat, ((0, 0), (0, F_pad - F)))
        lam_flat = jnp.pad(lam_flat, ((0, 0), (0, F_pad - F)))
    if B_pad != B:
        xyz_flat = jnp.pad(xyz_flat, ((0, B_pad - B), (0, 0)))
        lam_flat = jnp.pad(lam_flat, ((0, B_pad - B), (0, 0)))

    itemsize = jnp.dtype(xyzadj.dtype).itemsize
    bb, bf = _choose_tiles(B_pad, F_pad, itemsize,
                           target_tile_bytes=target_tile_bytes)

    adj_flat, wsig_flat = pl.pallas_call(
        _adj_kernel,
        out_shape=(
            jax.ShapeDtypeStruct((B_pad, F_pad), xyzadj.dtype),
            jax.ShapeDtypeStruct((1, F_pad), weight.dtype),
        ),
        grid_spec=pltpu.PrefetchScalarGridSpec(
            num_scalar_prefetch=0,
            # Lane axis outermost, batch axis innermost: the weight tile's
            # block index is invariant along the inner axis.
            grid=(F_pad // bf, B_pad // bb),
            in_specs=[
                pl.BlockSpec((1, bf), lambda j, b: (0, j)),    # raw weight
                pl.BlockSpec((bb, bf), lambda j, b: (b, j)),   # xyzadj
                pl.BlockSpec((bb, bf), lambda j, b: (b, j)),   # lamdaadj
            ],
            out_specs=(
                pl.BlockSpec((bb, bf), lambda j, b: (b, j)),   # adj
                pl.BlockSpec((1, bf), lambda j, b: (0, j)),    # sigmoid(weight)
            ),
        ),
        compiler_params=pltpu.CompilerParams(
            # Batch axis is "arbitrary": the sigmoid(weight) output block is
            # resident (same block index) across it.
            dimension_semantics=("parallel", "arbitrary")),
    )(w_flat, xyz_flat, lam_flat)

    adj = adj_flat[:B, :F].reshape(B, N, N)
    w_sig = wsig_flat[0, :F].reshape(N, N)
    return adj, w_sig


if __name__ == "__main__":
    key = jax.random.PRNGKey(0)
    k_w, k_x, k_l = jax.random.split(key, 3)

    B = 2          # batch of adjacency matrices
    npoint = 16    # self.npoint

    # Deterministic init mirroring reset_parameters(): uniform_(0, 1)
    weight = jax.random.uniform(k_w, (npoint, npoint), dtype=jnp.float32,
                                minval=0.0, maxval=1.0)
    xyzadj = jax.random.uniform(k_x, (B, npoint, npoint), dtype=jnp.float32)
    lamdaadj = jax.random.uniform(k_l, (B, npoint, npoint), dtype=jnp.float32)

    # Plain-JAX reference.
    w_ref = jax.nn.sigmoid(weight)
    adj_ref = w_ref[None] * xyzadj + (1.0 - w_ref)[None] * lamdaadj

    adj, new_weight = adjattention_forward(weight, xyzadj, lamdaadj)
    jax.block_until_ready(adj)
    jax.block_until_ready(new_weight)

    assert adj.shape == (B, npoint, npoint)
    assert new_weight.shape == (npoint, npoint)
    assert jnp.allclose(adj, adj_ref, atol=1e-6), "adj mismatch"
    assert jnp.allclose(new_weight, w_ref, atol=1e-6), "weight mismatch"

    # TODO(synk): PyTorch mutates self.weight in place; in functional JAX the
    # caller must re-bind the parameter to `new_weight`.
    print("KERNEL_OK")
</pallas_src>

<mosaic_0001>
module attributes {stable_mosaic.version = 11 : i64} {
  func.func @_adj_kernel(%arg0: i32, %arg1: i32, %arg2: memref<1x256xf32, #tpu.memory_space<vmem>>, %arg3: memref<8x256xf32, #tpu.memory_space<vmem>>, %arg4: memref<8x256xf32, #tpu.memory_space<vmem>>, %arg5: memref<8x256xf32, #tpu.memory_space<vmem>>, %arg6: memref<1x256xf32, #tpu.memory_space<vmem>>) attributes {dimension_semantics = [#tpu.dimension_semantics<parallel>, #tpu.dimension_semantics<arbitrary>], iteration_bounds = array<i64: 1, 1>, scalar_prefetch = 0 : i64, scratch_operands = 0 : i64, tpu.core_type = #tpu.core_type<tc>, window_params = [{transform_indices = @transform_0, window_bounds = array<i64: 1, 256>}, {transform_indices = @transform_1, window_bounds = array<i64: 8, 256>}, {transform_indices = @transform_2, window_bounds = array<i64: 8, 256>}, {transform_indices = @transform_3, window_bounds = array<i64: 8, 256>}, {transform_indices = @transform_4, window_bounds = array<i64: 1, 256>}]} {
    %c0 = arith.constant 0 : index
    %c0_0 = arith.constant 0 : index
    %0 = vector.load %arg2[%c0, %c0_0] : memref<1x256xf32, #tpu.memory_space<vmem>>, vector<1x256xf32>
    %1 = arith.negf %0 : vector<1x256xf32>
    %2 = math.exp %1 : vector<1x256xf32>
    %cst = arith.constant 1.000000e+00 : f32
    %3 = vector.broadcast %cst : f32 to vector<1x256xf32>
    %4 = arith.addf %3, %2 : vector<1x256xf32>
    %5 = arith.divf %3, %4 : vector<1x256xf32>
    %c0_i32 = arith.constant 0 : i32
    %6 = arith.cmpi eq, %arg1, %c0_i32 : i32
    %7 = arith.extui %6 : i1 to i32
    %c0_i32_1 = arith.constant 0 : i32
    %8 = arith.cmpi ne, %7, %c0_i32_1 : i32
    scf.if %8 {
      %c0_8 = arith.constant 0 : index
      %c0_9 = arith.constant 0 : index
      %16 = vector.load %arg6[%c0_8, %c0_9] : memref<1x256xf32, #tpu.memory_space<vmem>>, vector<1x256xf32>
      tpu.vector_store %arg6[%c0_8, %c0_9], %5 {strides = array<i32>} : memref<1x256xf32, #tpu.memory_space<vmem>>, vector<1x256xf32>,
    } else {
    }
    %c0_2 = arith.constant 0 : index
    %c0_3 = arith.constant 0 : index
    %9 = vector.load %arg3[%c0_2, %c0_3] : memref<8x256xf32, #tpu.memory_space<vmem>>, vector<8x256xf32>
    %c0_4 = arith.constant 0 : index
    %c0_5 = arith.constant 0 : index
    %10 = vector.load %arg4[%c0_4, %c0_5] : memref<8x256xf32, #tpu.memory_space<vmem>>, vector<8x256xf32>
    %11 = arith.subf %9, %10 : vector<8x256xf32>
    %12 = vector.broadcast %5 : vector<1x256xf32> to vector<8x256xf32>
    %13 = arith.mulf %12, %11 : vector<8x256xf32>
    %14 = arith.addf %10, %13 : vector<8x256xf32>
    %c0_6 = arith.constant 0 : index
    %c0_7 = arith.constant 0 : index
    %15 = vector.load %arg5[%c0_6, %c0_7] : memref<8x256xf32, #tpu.memory_space<vmem>>, vector<8x256xf32>
    tpu.vector_store %arg5[%c0_6, %c0_7], %14 {strides = array<i32>} : memref<8x256xf32, #tpu.memory_space<vmem>>, vector<8x256xf32>,
    return
  }
  func.func @transform_0(%arg0: i32, %arg1: i32) -> (i32, i32) {
    %c0_i32 = arith.constant 0 : i32
    %c0_i32_0 = arith.constant 0 : i32
    return %c0_i32, %arg0 : i32, i32
  }
  func.func @transform_1(%arg0: i32, %arg1: i32) -> (i32, i32) {
    %c0_i32 = arith.constant 0 : i32
    return %arg1, %arg0 : i32, i32
  }
  func.func @transform_2(%arg0: i32, %arg1: i32) -> (i32, i32) {
    %c0_i32 = arith.constant 0 : i32
    return %arg1, %arg0 : i32, i32
  }
  func.func @transform_3(%arg0: i32, %arg1: i32) -> (i32, i32) {
    %c0_i32 = arith.constant 0 : i32
    return %arg1, %arg0 : i32, i32
  }
  func.func @transform_4(%arg0: i32, %arg1: i32) -> (i32, i32) {
    %c0_i32 = arith.constant 0 : i32
    %c0_i32_0 = arith.constant 0 : i32
    return %c0_i32, %arg0 : i32, i32
  }
}

</mosaic_0001>

<llo_original>
// kernel: tpu_custom_call.1
$region0: #{tpu_custom_call.1}
  #allocation0 [shape = 'u32[]', space=smem, size = 0x4, offset = 0x4, fixed_abs, tag = 'smem constant byte address 0x4 - core index']
  #allocation1 [shape = 'u32[72,128]{1,0:T(1,128)}', space=vmem, size = 0x9000, scoped, tag = 'internal scratch']
  %s0 = inlined_call_operand.hbm [shape: f32[1,256], index: 0, kind: input, shape index: {}]
  %s1 = inlined_call_operand.hbm [shape: f32[8,256], index: 1, kind: input, shape index: {}]
  %s2 = inlined_call_operand.hbm [shape: f32[8,256], index: 2, kind: input, shape index: {}]
  %s3 = inlined_call_operand.hbm [shape: f32[8,256], index: 3, kind: output, shape index: {0}]
  %s4 = inlined_call_operand.hbm [shape: f32[1,256], index: 4, kind: output, shape index: {1}]
  %5 = xla_tuple %s3, %s4
  %s6 = sld [smem:[#allocation0]]
  $region46: #{tpu_custom_call.1} parent=0
    _
  %s8 = ssub.s32 1, %s6
  %s9 = scalar_select 0, %s8, %s6
  $region1: #{tpu_custom_call.1} parent=0
    #allocation2 [shape = 'u8[1024]{0}', space=vmem, size = 0x400, scoped, tag = 'input window, operand 0, single buffered']
    #allocation3 [shape = 's32[1]{0}', space=sflag, size = 0x4, scoped, tag = 'scoped memory for tpu_custom_call.1']
    #allocation4 [shape = 's32[1]{0}', space=sflag, size = 0x4, scoped, tag = 'scoped memory for tpu_custom_call.1']
    #allocation5 [shape = 'u8[8192]{0}', space=vmem, size = 0x2000, scoped, tag = 'input window, operand 1, single buffered']
    #allocation6 [shape = 's32[1]{0}', space=sflag, size = 0x4, scoped, tag = 'scoped memory for tpu_custom_call.1']
    #allocation7 [shape = 'u8[8192]{0}', space=vmem, size = 0x2000, scoped, tag = 'input window, operand 2, single buffered']
    #allocation8 [shape = 'u8[8192]{0}', space=vmem, size = 0x2000, scoped, tag = 'output window, operand 0, single buffered']
    #allocation9 [shape = 'u8[1024]{0}', space=vmem, size = 0x400, scoped, tag = 'output window, operand 1, single buffered']
    #allocation10 [shape = 's32[1]{0}', space=sflag, size = 0x4, scoped, tag = 'scoped memory for tpu_custom_call.1']
    %10 = vsyncpa [#allocation3], 0
    %11 = vsyncpa [#allocation6], 0
    %12 = vsyncpa [#allocation4], 0
    %13 = vsyncpa [#allocation10], 0
    // Predicated region
    $region2: #{tpu_custom_call.1} parent=1 // pred_check
      _
    $region3: #{tpu_custom_call.1} parent=1 // pred_check_branch
      %15 = sbr.rel (0) target = $region5
    $region4: #{tpu_custom_call.1} parent=1 // pred_region
      %17 = vsyncadd [#allocation3], 0
      %s19 = sshll.u32 %s0, 4
      %s20 = int_to_ptr.hbm [resolvable:$true] %s19
      %s21 = sshll.u32 [#allocation2], 4
      %s22 = int_to_ptr.vmem [resolvable:$true] %s21
      %24 = dma.hbm_to_vmem [thread:$0]  %s20, 32, %s22, [#allocation3]
    $region5: #{tpu_custom_call.1} parent=1 // pred_fallthru
      _
    // Predicated region
    $region6: #{tpu_custom_call.1} parent=1 // pred_check
      _
    $region7: #{tpu_custom_call.1} parent=1 // pred_check_branch
      %26 = sbr.rel (0) target = $region9
    $region8: #{tpu_custom_call.1} parent=1 // pred_region
      %28 = vsyncadd [#allocation6], 0
      %s30 = sshll.u32 %s1, 4
      %s31 = int_to_ptr.hbm [resolvable:$true] %s30
      %s32 = sshll.u32 [#allocation5], 4
      %s33 = int_to_ptr.vmem [resolvable:$true] %s32
      %35 = dma.hbm_to_vmem [thread:$0]  %s31, 256, %s33, [#allocation6]
    $region9: #{tpu_custom_call.1} parent=1 // pred_fallthru
      _
    // Predicated region
    $region10: #{tpu_custom_call.1} parent=1 // pred_check
      _
    $region11: #{tpu_custom_call.1} parent=1 // pred_check_branch
      %37 = sbr.rel (0) target = $region13
    $region12: #{tpu_custom_call.1} parent=1 // pred_region
      %39 = vsyncadd [#allocation6], 0
      %s41 = sshll.u32 %s2, 4
      %s42 = int_to_ptr.hbm [resolvable:$true] %s41
      %s43 = sshll.u32 [#allocation7], 4
      %s44 = int_to_ptr.vmem [resolvable:$true] %s43
      %46 = dma.hbm_to_vmem [thread:$0]  %s42, 256, %s44, [#allocation6]
    $region13: #{tpu_custom_call.1} parent=1 // pred_fallthru
      _
    // Predicated region
    $region14: #{tpu_custom_call.1} parent=1 // pred_check
      _
    $region15: #{tpu_custom_call.1} parent=1 // pred_check_branch
      %48 = sbr.rel (0) target = $region17
    $region16: #{tpu_custom_call.1} parent=1 // pred_region
      %50 = dma.done [#allocation3], 32
    $region17: #{tpu_custom_call.1} parent=1 // pred_fallthru
      _
    // Predicated region
    $region18: #{tpu_custom_call.1} parent=1 // pred_check
      _
    $region19: #{tpu_custom_call.1} parent=1 // pred_check_branch
      %52 = sbr.rel (0) target = $region21
    $region20: #{tpu_custom_call.1} parent=1 // pred_region
      %54 = dma.done [#allocation6], 256
    $region21: #{tpu_custom_call.1} parent=1 // pred_fallthru
      _
    // Predicated region
    $region22: #{tpu_custom_call.1} parent=1 // pred_check
      _
    $region23: #{tpu_custom_call.1} parent=1 // pred_check_branch
      %56 = sbr.rel (0) target = $region25
    $region24: #{tpu_custom_call.1} parent=1 // pred_region
      %58 = dma.done [#allocation6], 256
    $region25: #{tpu_custom_call.1} parent=1 // pred_fallthru
      _
    %v59 = vld [vmem:[#allocation2] sm:$0x3]
    %v60 = vxor.u32 %v59, 2147483648
    %v61 = vmul.f32 %v60, 1.442695
    %v62 = vpow.pop %v61
    %v63 = vadd.f32 %v62, 1.0
    %v64 = vrcp.pop %v63
    %v65 = vmul.f32 %v63, %v64
    %v66 = vsub.f32 1.0, %v65
    %v67 = vmul.f32 %v64, %v66
    %v68 = vadd.f32 %v64, %v67
    %vm69 = vweird.f32 %v63
    %vm70 = vweird.f32 %v64
    %vm71 = vmor %vm69, %vm70
    %v72 = vsel %vm71, %v64, %v68
    %v73 = vand.u32 2147483647, %v63
    %vm74 = vcmp.eq.f32.partialorder %v73, 8.507059e+37
    %v75 = vand.u32 %v63, 2147483648
    %v76 = vor.u32 1.1754944e-38, %v75
    %v77 = vsel %vm74, %v76, %v72
    %v78 = vmul.f32 1.0, %v77
    %p79 = scmp.eq.s32.totalorder 0, 0
    // Predicated region
    $region26: #{tpu_custom_call.1} parent=1 // pred_check
      %p80 = pneg %p79
    $region27: #{tpu_custom_call.1} parent=1 // pred_check_branch
      %82 = sbr.rel (%p80) target = $region29
    $region28: #{tpu_custom_call.1} parent=1 // pred_region
      %v83 = vlaneseq
      %vm84 = vcmp.ge.s32.totalorder %v83, 0
      %vm85 = vcmp.lt.s32.totalorder %v83, 256
      %vm86 = vmand %vm84, %vm85
      %87 = vst.msk [vmem:[#allocation9] sm:$0x3] %vm86, %v78
    $region29: #{tpu_custom_call.1} parent=1 // pred_fallthru
      _
    %v88 = vld [vmem:[#allocation5] sm:$0xff]
    %v89 = vld [vmem:[#allocation5 + $0x8] sm:$0xff]
    %v90 = vld [vmem:[#allocation7] sm:$0xff]
    %v91 = vld [vmem:[#allocation7 + $0x8] sm:$0xff]
    %v92 = vsub.f32 %v88, %v90
    %v93 = vsub.f32 %v89, %v91
    %v95 = vperm.slane %v78, 0
    %v96 = vperm.slane %v78, 1
    %v99 = vmul.f32 %v95, %v92
    %v100 = vmul.f32 %v96, %v93
    %v101 = vadd.f32 %v90, %v99
    %v102 = vadd.f32 %v91, %v100
    %103 = vst [vmem:[#allocation8] sm:$0xff] %v101
    %104 = vst [vmem:[#allocation8 + $0x8] sm:$0xff] %v102
    // Predicated region
    $region30: #{tpu_custom_call.1} parent=1 // pred_check
      _
    $region31: #{tpu_custom_call.1} parent=1 // pred_check_branch
      %106 = sbr.rel (0) target = $region33
    $region32: #{tpu_custom_call.1} parent=1 // pred_region
      %108 = vsyncadd [#allocation4], 0
      %s110 = sshll.u32 [#allocation8], 4
      %s111 = int_to_ptr.vmem [resolvable:$true] %s110
      %s112 = sshll.u32 %s3, 4
      %s113 = int_to_ptr.hbm [resolvable:$true] %s112
      %115 = dma.vmem_to_hbm [thread:$0]  %s111, 256, %s113, [#allocation4]
    $region33: #{tpu_custom_call.1} parent=1 // pred_fallthru
      _
    // Predicated region
    $region34: #{tpu_custom_call.1} parent=1 // pred_check
      _
    $region35: #{tpu_custom_call.1} parent=1 // pred_check_branch
      %117 = sbr.rel (0) target = $region37
    $region36: #{tpu_custom_call.1} parent=1 // pred_region
      %119 = vsyncadd [#allocation10], 0
      %s121 = sshll.u32 [#allocation9], 4
      %s122 = int_to_ptr.vmem [resolvable:$true] %s121
      %s123 = sshll.u32 %s4, 4
      %s124 = int_to_ptr.hbm [resolvable:$true] %s123
      %126 = dma.vmem_to_hbm [thread:$0]  %s122, 32, %s124, [#allocation10]
    $region37: #{tpu_custom_call.1} parent=1 // pred_fallthru
      _
    // Predicated region
    $region38: #{tpu_custom_call.1} parent=1 // pred_check
      _
    $region39: #{tpu_custom_call.1} parent=1 // pred_check_branch
      %128 = sbr.rel (0) target = $region41
    $region40: #{tpu_custom_call.1} parent=1 // pred_region
      %130 = dma.done [#allocation4], 256
    $region41: #{tpu_custom_call.1} parent=1 // pred_fallthru
      _
    // Predicated region
    $region42: #{tpu_custom_call.1} parent=1 // pred_check
      _
    $region43: #{tpu_custom_call.1} parent=1 // pred_check_branch
      %132 = sbr.rel (0) target = $region45
    $region44: #{tpu_custom_call.1} parent=1 // pred_region
      %134 = dma.done [#allocation10], 32
    $region45: #{tpu_custom_call.1} parent=1 // pred_fallthru
      _
    %135 = vsyncpa [#allocation3], 1
    %136 = vsyncpa [#allocation6], 1
    %137 = vsyncpa [#allocation4], 1
    %138 = vsyncpa [#allocation10], 1

</llo_original>
